<compile_context>
chip_gen: v6e
topology: v6e:2x2x1
jax: 0.10.0
libtpu: 0.0.40
codegen_flags: <defaults>
</compile_context>

<pallas_src>
import functools

import jax
import jax.numpy as jnp
from jax.experimental import pallas as pl
from jax.experimental.pallas import tpu as pltpu


def _round_up(x: int, m: int) -> int:
    return ((x + m - 1) // m) * m


# --------------------------------------------------------------------------------------
# Kernel: pure (TB, Dp) @ (Dp, TN) MXU matmul, f32 accumulation, optional acos on the EUP.
# --------------------------------------------------------------------------------------
def _cosine_matmul_kernel(x_ref, g_ref, o_ref, *, inv_tau: float, use_acos: bool):
    logits = jnp.dot(x_ref[...], g_ref[...], preferred_element_type=jnp.float32)
    if use_acos:
        # torch.acos does not clamp; out-of-domain values become NaN, same as arccos here.
        logits = jnp.arccos(logits) * inv_tau
    # When use_acos=False, 1/tau was folded into gts at __init__ time (no per-element mul).
    o_ref[...] = logits.astype(o_ref.dtype)


# --------------------------------------------------------------------------------------
# Tile selection: clamp to problem size, force >=2 N-tiles for v7x when B fits one tile,
# then shrink to a double-buffered VMEM budget that is safe on v5e/v6e/v7x.
# --------------------------------------------------------------------------------------
_VMEM_BUDGET_BYTES = 24 * 1024 * 1024  # double-buffered working-set budget
_VMEM_LIMIT_BYTES = 32 * 1024 * 1024   # scoped limit we ask the compiler for


def _select_tiles(B: int, N: int, Dp: int, in_bytes: int, out_bytes: int,
                  block_b: int, block_n: int):
    block_b = min(block_b, _round_up(B, 8))
    block_n = min(block_n, _round_up(N, 128))

    # v7x megacore: if the whole batch fits in one tile, make sure the N axis still
    # produces >= 2 grid tiles so both TensorCores get work.
    if pl.cdiv(B, block_b) == 1 and _round_up(N, 128) >= 256:
        block_n = min(block_n, _round_up(pl.cdiv(N, 2), 128))

    def working_set(bb, bn):
        # inputs + gts tile + f32 output tile, double-buffered by the pipeline.
        return 2 * (bb * Dp * in_bytes + Dp * bn * in_bytes + bb * bn * out_bytes)

    # Shrink batch tile first (keeps the lane-dense N tile maximal), then N tile.
    while working_set(block_b, block_n) > _VMEM_BUDGET_BYTES and block_b > 8:
        block_b = max(8, _round_up(block_b // 2, 8))
    while working_set(block_b, block_n) > _VMEM_BUDGET_BYTES and block_n > 128:
        block_n = max(128, _round_up(block_n // 2, 128))

    return block_b, block_n


# --------------------------------------------------------------------------------------
# __init__-time parameter setup (done ONCE, plain JAX): normalize, fold 1/tau, transpose,
# pad D to a multiple of 128 (zeros are exact for both the norm and the dot), cast.
# --------------------------------------------------------------------------------------
def prepare_gts(gts: jax.Array, tau: float = 1.0, use_acos: bool = False,
                compute_dtype=jnp.bfloat16) -> jax.Array:
    N, D = gts.shape
    g = gts.astype(jnp.float32)
    g = g / jnp.linalg.norm(g, axis=-1, keepdims=True)
    if not use_acos:
        g = g * (1.0 / float(tau))  # fold 1/tau into the constant operand
    g_t = g.T  # (D, N): lane-dense N, no in-kernel transpose
    Dp = _round_up(D, 128)
    if Dp != D:
        g_t = jnp.pad(g_t, ((0, Dp - D), (0, 0)))
    return g_t.astype(compute_dtype)


# --------------------------------------------------------------------------------------
# Forward pass.
# --------------------------------------------------------------------------------------
def cosine_similarity_forward(image_features: jax.Array,
                              gts_t: jax.Array,
                              tau: float = 1.0,
                              use_acos: bool = False,
                              block_b: int = 1024,
                              block_n: int = 512) -> jax.Array:
    """image_features: (B, D); gts_t: (Dp, N) prepared by prepare_gts -> logits (B, N) f32."""
    B, D = image_features.shape
    Dp, N = gts_t.shape
    assert Dp == _round_up(D, 128), "gts_t was prepared for a different feature dim"

    inv_tau = 1.0 / float(tau)
    compute_dtype = gts_t.dtype
    in_bytes = jnp.dtype(compute_dtype).itemsize

    # Hoisted row-normalization (one small fused XLA pass over B*D), then pad D + cast.
    x = image_features.astype(jnp.float32)
    x = x / jnp.linalg.norm(x, axis=-1, keepdims=True)
    if Dp != D:
        x = jnp.pad(x, ((0, 0), (0, Dp - D)))
    x = x.astype(compute_dtype)

    block_b, block_n = _select_tiles(B, N, Dp, in_bytes, 4, block_b, block_n)
    grid = (pl.cdiv(B, block_b), pl.cdiv(N, block_n))

    kernel = functools.partial(_cosine_matmul_kernel,
                               inv_tau=inv_tau, use_acos=bool(use_acos))

    cost = pl.CostEstimate(
        flops=2 * B * N * Dp,
        transcendentals=(B * N if use_acos else 0),
        bytes_accessed=(B * Dp * in_bytes            # x streamed once
                        + grid[0] * N * Dp * in_bytes  # gts streamed per batch tile
                        + B * N * 4),                # f32 output
    )

    out = pl.pallas_call(
        kernel,
        out_shape=jax.ShapeDtypeStruct((B, N), jnp.float32),
        grid_spec=pltpu.PrefetchScalarGridSpec(
            num_scalar_prefetch=0,
            grid=grid,
            in_specs=[
                # x: tile over batch, full (padded) feature dim (contraction axis).
                pl.BlockSpec((block_b, Dp), lambda i, j: (i, 0)),
                # gts^T: full Dp, tile over N (lane axis).
                pl.BlockSpec((Dp, block_n), lambda i, j: (0, j)),
            ],
            out_specs=pl.BlockSpec((block_b, block_n), lambda i, j: (i, j)),
        ),
        compiler_params=pltpu.CompilerParams(
            dimension_semantics=("parallel", "parallel"),
            vmem_limit_bytes=_VMEM_LIMIT_BYTES,
        ),
        cost_estimate=cost,
    )(x, gts_t)
    return out


class CosineSimilarity:
    """Mirrors the PyTorch module: gts preparation happens once in __init__."""

    def __init__(self, gts: jax.Array, tau: float = 1.0, use_acos: bool = False,
                 compute_dtype=jnp.bfloat16):
        self.tau = float(tau)
        self.use_acos = bool(use_acos)
        self.gts_t = prepare_gts(gts, tau=tau, use_acos=use_acos,
                                 compute_dtype=compute_dtype)

    def __call__(self, image_features: jax.Array) -> jax.Array:
        return cosine_similarity_forward(image_features, self.gts_t,
                                         tau=self.tau, use_acos=self.use_acos)


def _reference(image_features, gts, tau=1.0, use_acos=False):
    gts_n = gts / jnp.linalg.norm(gts, axis=-1, keepdims=True)
    x_n = image_features / jnp.linalg.norm(image_features, axis=-1, keepdims=True)
    logits = x_n @ gts_n.T
    if use_acos:
        logits = jnp.arccos(logits)
    return logits / tau


if __name__ == "__main__":
    key = jax.random.PRNGKey(0)
    k_x, k_g, k_x2, k_g2 = jax.random.split(key, 4)

    # Small shapes consistent with the module: batch=16, hidden=64, 32 gt embeddings.
    B, D, N = 16, 64, 32
    tau = 0.5

    x = jax.random.normal(k_x, (B, D), dtype=jnp.float32)
    gts = jax.random.normal(k_g, (N, D), dtype=jnp.float32)

    # 1) f32 compute path (exactness check, tight tolerance).
    mod_f32 = CosineSimilarity(gts, tau=tau, use_acos=False, compute_dtype=jnp.float32)
    out_f32 = jax.block_until_ready(mod_f32(x))
    ref = _reference(x, gts, tau=tau, use_acos=False)
    assert out_f32.shape == (B, N)
    assert jnp.allclose(out_f32, ref, atol=1e-5, rtol=1e-5), "mismatch (f32, use_acos=False)"

    # 2) bf16 compute path (default, fast; ~1e-3 relative error expected).
    mod_bf16 = CosineSimilarity(gts, tau=tau, use_acos=False)
    out_bf16 = jax.block_until_ready(mod_bf16(x))
    assert jnp.allclose(out_bf16, ref, atol=2e-2, rtol=2e-2), "mismatch (bf16, use_acos=False)"

    # 3) acos path (bf16 operands, f32 acos on the EUP).
    mod_acos = CosineSimilarity(gts, tau=tau, use_acos=True)
    out_acos = jax.block_until_ready(mod_acos(x))
    ref_acos = _reference(x, gts, tau=tau, use_acos=True)
    assert jnp.allclose(out_acos, ref_acos, atol=2e-2, rtol=2e-2), "mismatch (use_acos=True)"

    # 4) Ragged shapes (exercise edge blocks: non-divisible B and N, no pad/slice on outputs).
    B2, N2 = 10, 50
    x2 = jax.random.normal(k_x2, (B2, D), dtype=jnp.float32)
    gts2 = jax.random.normal(k_g2, (N2, D), dtype=jnp.float32)
    mod2 = CosineSimilarity(gts2, tau=tau, use_acos=False)
    out2 = jax.block_until_ready(mod2(x2))
    ref2 = _reference(x2, gts2, tau=tau, use_acos=False)
    assert out2.shape == (B2, N2)
    assert jnp.allclose(out2, ref2, atol=2e-2, rtol=2e-2), "mismatch (ragged)"

    print("KERNEL_OK")
</pallas_src>

<mosaic_0001>
module attributes {stable_mosaic.version = 11 : i64} {
  func.func @_cosine_matmul_kernel(%arg0: i32, %arg1: i32, %arg2: memref<16x128xf32, #tpu.memory_space<vmem>>, %arg3: memref<128x128xf32, #tpu.memory_space<vmem>>, %arg4: memref<16x128xf32, #tpu.memory_space<vmem>>) attributes {dimension_semantics = [#tpu.dimension_semantics<parallel>, #tpu.dimension_semantics<parallel>], iteration_bounds = array<i64: 1, 1>, scalar_prefetch = 0 : i64, scratch_operands = 0 : i64, tpu.core_type = #tpu.core_type<tc>, window_params = [{transform_indices = @transform_0, window_bounds = array<i64: 16, 128>}, {transform_indices = @transform_1, window_bounds = array<i64: 128, 128>}, {transform_indices = @transform_2, window_bounds = array<i64: 16, 128>}]} {
    %c0 = arith.constant 0 : index
    %c0_0 = arith.constant 0 : index
    %0 = vector.load %arg2[%c0, %c0_0] : memref<16x128xf32, #tpu.memory_space<vmem>>, vector<16x128xf32>
    %c0_1 = arith.constant 0 : index
    %c0_2 = arith.constant 0 : index
    %1 = vector.load %arg3[%c0_1, %c0_2] : memref<128x128xf32, #tpu.memory_space<vmem>>, vector<128x128xf32>
    %cst = arith.constant dense<0.000000e+00> : vector<16x128xf32>
    %2 = tpu.matmul %0, %1, %cst {dimension_numbers = #tpu.dot_dimension_numbers<[1], [0], [0], [1], [0, 0, 1, 1], [], []>} : vector<16x128xf32>, vector<128x128xf32>, vector<16x128xf32> -> vector<16x128xf32>
    %c0_3 = arith.constant 0 : index
    %c0_4 = arith.constant 0 : index
    %3 = vector.load %arg4[%c0_3, %c0_4] : memref<16x128xf32, #tpu.memory_space<vmem>>, vector<16x128xf32>
    tpu.vector_store %arg4[%c0_3, %c0_4], %2 {strides = array<i32>} : memref<16x128xf32, #tpu.memory_space<vmem>>, vector<16x128xf32>,
    return
  }
  func.func @transform_0(%arg0: i32, %arg1: i32) -> (i32, i32) {
    %c0_i32 = arith.constant 0 : i32
    %c0_i32_0 = arith.constant 0 : i32
    return %arg0, %c0_i32 : i32, i32
  }
  func.func @transform_1(%arg0: i32, %arg1: i32) -> (i32, i32) {
    %c0_i32 = arith.constant 0 : i32
    %c0_i32_0 = arith.constant 0 : i32
    return %c0_i32, %arg1 : i32, i32
  }
  func.func @transform_2(%arg0: i32, %arg1: i32) -> (i32, i32) {
    %c0_i32 = arith.constant 0 : i32
    return %arg0, %arg1 : i32, i32
  }
}

</mosaic_0001>

<llo_original>
// kernel: tpu_custom_call.1
$region0: #{tpu_custom_call.1}
  #allocation0 [shape = 'u32[]', space=smem, size = 0x4, offset = 0x4, fixed_abs, tag = 'smem constant byte address 0x4 - core index']
  #allocation1 [shape = 'u32[144,128]{1,0:T(1,128)}', space=vmem, size = 0x12000, scoped, tag = 'internal scratch']
  %s0 = inlined_call_operand.vmem [shape: f32[16,128], index: 0, kind: input, shape index: {}]
  %s1 = inlined_call_operand.vmem [shape: f32[128,32], index: 1, kind: input, shape index: {}]
  %s2 = inlined_call_operand.hbm [shape: f32[16,32], index: 2, kind: output, shape index: {}]
  %s3 = sld [smem:[#allocation0]]
  $region18: #{tpu_custom_call.1} parent=0
    _
  %s5 = ssub.s32 1, %s3
  %s6 = scalar_select 0, %s5, %s3
  $region1: #{tpu_custom_call.1} parent=0
    #allocation2 [shape = 'u8[8192]{0}', space=vmem, size = 0x2000, scoped, tag = 'output window, operand 0, single buffered']
    #allocation3 [shape = 's32[1]{0}', space=sflag, size = 0x4, scoped, tag = 'scoped memory for tpu_custom_call.1']
    %7 = vsyncpa [#allocation3], 0
    // Predicated region
    $region2: #{tpu_custom_call.1} parent=1 // pred_check
      _
    $region3: #{tpu_custom_call.1} parent=1 // pred_check_branch
      %9 = sbr.rel (0) target = $region5
    $region4: #{tpu_custom_call.1} parent=1 // pred_region
      _
    $region5: #{tpu_custom_call.1} parent=1 // pred_fallthru
      _
    // Predicated region
    $region6: #{tpu_custom_call.1} parent=1 // pred_check
      _
    $region7: #{tpu_custom_call.1} parent=1 // pred_check_branch
      %11 = sbr.rel (0) target = $region9
    $region8: #{tpu_custom_call.1} parent=1 // pred_region
      _
    $region9: #{tpu_custom_call.1} parent=1 // pred_fallthru
      _
    %v12 = vld [vmem:[%s0] sm:$0xff]
    %v13 = vld [vmem:[%s0 + $0x8] sm:$0xff]
    %v14 = vld [vmem:[%s1] sm:$0xff]
    %v15 = vld [vmem:[%s1 + $0x8] sm:$0xff]
    %v16 = vld [vmem:[%s1 + $0x10] sm:$0xff]
    %v17 = vld [vmem:[%s1 + $0x18] sm:$0xff]
    %v18 = vld [vmem:[%s1 + $0x20] sm:$0xff]
    %v19 = vld [vmem:[%s1 + $0x28] sm:$0xff]
    %v20 = vld [vmem:[%s1 + $0x30] sm:$0xff]
    %v21 = vld [vmem:[%s1 + $0x38] sm:$0xff]
    %v22 = vld [vmem:[%s1 + $0x40] sm:$0xff]
    %v23 = vld [vmem:[%s1 + $0x48] sm:$0xff]
    %v24 = vld [vmem:[%s1 + $0x50] sm:$0xff]
    %v25 = vld [vmem:[%s1 + $0x58] sm:$0xff]
    %v26 = vld [vmem:[%s1 + $0x60] sm:$0xff]
    %v27 = vld [vmem:[%s1 + $0x68] sm:$0xff]
    %v28 = vld [vmem:[%s1 + $0x70] sm:$0xff]
    %v29 = vld [vmem:[%s1 + $0x78] sm:$0xff]
    %30 = vmatprep.subr.mxu0 0.0
    %31 = vmatpush1.msra.mxu0 %v29
    %32 = vmatprep.subr.mxu0 0.0
    %33 = vmatpush1.msra.mxu0 %v28
    %34 = vmatprep.subr.mxu0 0.0
    %35 = vmatpush1.msra.mxu0 %v27
    %36 = vmatprep.subr.mxu0 0.0
    %37 = vmatpush1.msra.mxu0 %v26
    %38 = vmatprep.subr.mxu0 0.0
    %39 = vmatpush1.msra.mxu0 %v25
    %40 = vmatprep.subr.mxu0 0.0
    %41 = vmatpush1.msra.mxu0 %v24
    %42 = vmatprep.subr.mxu0 0.0
    %43 = vmatpush1.msra.mxu0 %v23
    %44 = vmatprep.subr.mxu0 0.0
    %45 = vmatpush1.msra.mxu0 %v22
    %46 = vmatprep.subr.mxu0 0.0
    %47 = vmatpush1.msra.mxu0 %v21
    %48 = vmatprep.subr.mxu0 0.0
    %49 = vmatpush1.msra.mxu0 %v20
    %50 = vmatprep.subr.mxu0 0.0
    %51 = vmatpush1.msra.mxu0 %v19
    %52 = vmatprep.subr.mxu0 0.0
    %53 = vmatpush1.msra.mxu0 %v18
    %54 = vmatprep.subr.mxu0 0.0
    %55 = vmatpush1.msra.mxu0 %v17
    %56 = vmatprep.subr.mxu0 0.0
    %57 = vmatpush1.msra.mxu0 %v16
    %58 = vmatprep.subr.mxu0 0.0
    %59 = vmatpush1.msra.mxu0 %v15
    %60 = vmatprep.subr.mxu0 0.0
    %61 = vmatpush1.msra.mxu0 %v14
    %62 = vmatprep.subr.mxu0 0.0
    %63 = vmatpush2.msra.mxu0 0.0
    %64 = vmatprep.subr.mxu0 0.0
    %65 = vmatpush2.msra.mxu0 0.0
    %66 = vmatprep.subr.mxu0 0.0
    %67 = vmatpush2.msra.mxu0 0.0
    %68 = vmatprep.subr.mxu0 0.0
    %69 = vmatpush2.msra.mxu0 0.0
    %70 = vmatprep.subr.mxu0 0.0
    %71 = vmatpush2.msra.mxu0 0.0
    %72 = vmatprep.subr.mxu0 0.0
    %73 = vmatpush2.msra.mxu0 0.0
    %74 = vmatprep.subr.mxu0 0.0
    %75 = vmatpush2.msra.mxu0 0.0
    %76 = vmatprep.subr.mxu0 0.0
    %77 = vmatpush2.msra.mxu0 0.0
    %78 = vmatprep.subr.mxu0 0.0
    %79 = vmatpush2.msra.mxu0 0.0
    %80 = vmatprep.subr.mxu0 0.0
    %81 = vmatpush2.msra.mxu0 0.0
    %82 = vmatprep.subr.mxu0 0.0
    %83 = vmatpush2.msra.mxu0 0.0
    %84 = vmatprep.subr.mxu0 0.0
    %85 = vmatpush2.msra.mxu0 0.0
    %86 = vmatprep.subr.mxu0 0.0
    %87 = vmatpush2.msra.mxu0 0.0
    %88 = vmatprep.subr.mxu0 0.0
    %89 = vmatpush2.msra.mxu0 0.0
    %90 = vmatprep.subr.mxu0 0.0
    %91 = vmatpush2.msra.mxu0 0.0
    %92 = vmatprep.subr.mxu0 0.0
    %93 = vmatpush2.msra.mxu0 0.0
    %94 = vmatprep.mubr.f32.mxu0 0.0
    %95 = vmatmul.mubr.f32.gmra.mxu0 %v12
    %v96 = vpop.f32.mrf.mxu0
    %v97 = vadd.f32 0.0, %v96
    %v98 = vpop.f32.mrf.mxu0
    %99 = vmatprep.mubr.f32.mxu0 0.0
    %100 = vmatmul.mubr.f32.gmra.mxu0 %v13
    %v101 = vpop.f32.mrf.mxu0
    %v102 = vadd.f32 0.0, %v101
    %v103 = vpop.f32.mrf.mxu0
    %104 = vdwg.mxu0
    %105 = vst [vmem:[#allocation2] sm:$0xff] %v97
    %106 = vst [vmem:[#allocation2 + $0x8] sm:$0xff] %v102
    // Predicated region
    $region10: #{tpu_custom_call.1} parent=1 // pred_check
      _
    $region11: #{tpu_custom_call.1} parent=1 // pred_check_branch
      %108 = sbr.rel (0) target = $region13
    $region12: #{tpu_custom_call.1} parent=1 // pred_region
      %s110 = ssub.s32 256, 256
      %111 = vsyncadd [#allocation3], %s110
      %s112 = sshll.u32 [#allocation2], 4
      %s113 = int_to_ptr.vmem [resolvable:$true] %s112
      %118 = dma.vmem_to_hbm [thread:$0]  %s113, 256, %s2, [#allocation3], 128, 128, 8
    $region13: #{tpu_custom_call.1} parent=1 // pred_fallthru
      _
    // Predicated region
    $region14: #{tpu_custom_call.1} parent=1 // pred_check
      _
    $region15: #{tpu_custom_call.1} parent=1 // pred_check_branch
      %120 = sbr.rel (0) target = $region17
    $region16: #{tpu_custom_call.1} parent=1 // pred_region
      %121 = dma.done [#allocation3], 256
    $region17: #{tpu_custom_call.1} parent=1 // pred_fallthru
      _
    %122 = vsyncpa [#allocation3], 1

</llo_original>
